<compile_context>
chip_gen: v7x
topology: tpu7x:2x2x1
jax: 0.10.0
libtpu: 0.0.40
codegen_flags: <defaults>
</compile_context>

<pallas_src>
import functools

import jax
import jax.numpy as jnp
from jax import lax
from jax.experimental import pallas as pl
from jax.experimental.pallas import tpu as pltpu


def _round_up(x, m):
    return (x + m - 1) // m * m


def _cdiv(a, b):
    return -(-a // b)


def _ffn_kernel(num_chunks, f_chunk, eps,
                alpha_ref, x_ref, w1_ref, b1_ref, w2_ref, b2_ref,
                gamma_ref, beta_ref, o_ref, acc_ref):
    """One row tile: acc = fc2(PReLU(fc1(x))); out = LN(x + acc + b2)."""
    act_dt = w1_ref.dtype                       # bf16 MXU / elementwise dtype
    alpha = alpha_ref[0].astype(act_dt)         # scalar PReLU slope from SMEM

    # Chunk the wide FFN dim.  The f32 accumulator lives in VMEM scratch, the
    # x tile is re-loaded from VMEM each chunk, and bias+PReLU run in bf16, so
    # the register live-set per chunk is ~ one (tile_m, f_chunk) value.
    for c in range(num_chunks):
        sl = pl.ds(c * f_chunk, f_chunk)                      # static slice
        h = jnp.dot(x_ref[...], w1_ref[:, sl],
                    preferred_element_type=jnp.float32)
        h = h.astype(act_dt) + b1_ref[:, sl]                  # bf16 bias add
        h = jnp.where(h >= 0, h, alpha * h)                   # bf16 PReLU
        part = jnp.dot(h, w2_ref[sl, :], preferred_element_type=jnp.float32)
        if c == 0:
            acc_ref[...] = part
        else:
            acc_ref[...] = acc_ref[...] + part

    # Residual (re-read x, upcast) + bias, then LayerNorm over hidden in f32.
    y = acc_ref[...] + b2_ref[...] + x_ref[...].astype(jnp.float32)
    mean = jnp.mean(y, axis=-1, keepdims=True)
    yc = y - mean
    var = jnp.mean(yc * yc, axis=-1, keepdims=True)
    y = yc * lax.rsqrt(var + jnp.float32(eps))
    o_ref[...] = (y * gamma_ref[...] + beta_ref[...]).astype(o_ref.dtype)


def dab_detr_decoder_ffn_pallas(hidden_states, w1, b1, w2, b2,
                                prelu_alpha, ln_weight, ln_bias, *,
                                max_tile_m=256, ffn_chunk=256, eps=1e-5,
                                compute_dtype=jnp.bfloat16):
    """Fused DabDetrDecoderLayerFFN: LayerNorm(x + fc2(PReLU(fc1(x)))).

    Weights are stored (in_features, out_features), i.e. transposed torch
    nn.Linear layout, so the kernel computes x @ W + b.
    Dropout / activation_dropout are identity (inference, training=False).
    MXU operands, the activation stream and the bias+PReLU stage use bf16;
    accumulation, residual and LayerNorm are f32 (expect ~bf16-level error
    vs an all-f32 reference).
    """
    lead = hidden_states.shape[:-1]
    hidden = hidden_states.shape[-1]
    ffn = w1.shape[1]
    assert w1.shape == (hidden, ffn) and w2.shape == (ffn, hidden)
    assert b1.shape == (ffn,) and b2.shape == (hidden,)

    # nn.PReLU() default = a single shared slope (matches HF DabDetr).
    alpha_arr = jnp.asarray(prelu_alpha, jnp.float32).reshape(-1)
    if alpha_arr.size != 1:
        raise ValueError("per-channel PReLU alpha is not supported by this kernel")

    x2d = hidden_states.reshape(-1, hidden)
    m = x2d.shape[0]

    # Row tiling derived from M: pad waste < 8 rows; force >= 2 row tiles for
    # medium/large M so both v7x TensorCores get work via the parallel axis.
    num_tiles = _cdiv(m, max_tile_m)
    if m > 128:
        num_tiles = max(num_tiles, 2)
    tile_m = max(8, _round_up(_cdiv(m, num_tiles), 8))
    m_pad = _round_up(m, tile_m)
    grid = (m_pad // tile_m,)

    # Stream activations in bf16 (the dtype the MXU consumes) to halve the
    # dominant per-row HBM read; the (rare, <8 rows) padding folds into it.
    x_in = x2d.astype(compute_dtype)
    if m_pad != m:
        x_in = jnp.pad(x_in, ((0, m_pad - m), (0, 0)))

    # FFN-dim chunking (fall back to the full dim if it does not divide).
    f_chunk = ffn_chunk if (0 < ffn_chunk <= ffn and ffn % ffn_chunk == 0) else ffn
    num_chunks = ffn // f_chunk

    w1c = w1.astype(compute_dtype)
    w2c = w2.astype(compute_dtype)
    b1r = b1.reshape(1, ffn).astype(compute_dtype)      # consumed in bf16 stage
    b2r = b2.reshape(1, hidden).astype(jnp.float32)
    gamma = ln_weight.reshape(1, hidden).astype(jnp.float32)
    beta = ln_bias.reshape(1, hidden).astype(jnp.float32)

    const = lambda i: (0, 0)
    in_specs = [
        pl.BlockSpec(memory_space=pltpu.MemorySpace.SMEM),    # PReLU slope
        pl.BlockSpec((tile_m, hidden), lambda i: (i, 0)),     # x row tile
        pl.BlockSpec(w1c.shape, const),                       # grid-invariant
        pl.BlockSpec(b1r.shape, const),
        pl.BlockSpec(w2c.shape, const),
        pl.BlockSpec(b2r.shape, const),
        pl.BlockSpec(gamma.shape, const),
        pl.BlockSpec(beta.shape, const),
    ]
    out_specs = pl.BlockSpec((tile_m, hidden), lambda i: (i, 0))

    # VMEM budget from the actual buffer footprint (+ headroom), not a blanket ask.
    bpe_c = jnp.dtype(compute_dtype).itemsize
    bpe_o = jnp.dtype(hidden_states.dtype).itemsize
    buf_bytes = (
        2 * tile_m * hidden * bpe_c                     # x tile (double-buffered)
        + 2 * tile_m * hidden * bpe_o                   # out tile
        + 2 * (hidden * ffn + ffn * hidden) * bpe_c     # w1, w2
        + 2 * ffn * bpe_c                               # b1
        + 2 * 3 * hidden * 4                            # b2, gamma, beta
        + tile_m * hidden * 4                           # f32 accumulator scratch
        + tile_m * max(f_chunk, hidden) * 4             # live intermediate headroom
    )
    vmem_limit = int(min(64 * 1024 * 1024, 2 * buf_bytes + 8 * 1024 * 1024))

    cost = pl.CostEstimate(
        flops=int(4 * m_pad * hidden * ffn),
        transcendentals=int(m_pad),                     # one rsqrt per row
        bytes_accessed=int(m_pad * hidden * (bpe_c + bpe_o)
                           + 2 * hidden * ffn * bpe_c),
    )

    kernel = functools.partial(_ffn_kernel, num_chunks, f_chunk, float(eps))

    out2d = pl.pallas_call(
        kernel,
        out_shape=jax.ShapeDtypeStruct((m_pad, hidden), hidden_states.dtype),
        grid_spec=pltpu.PrefetchScalarGridSpec(
            num_scalar_prefetch=0,
            grid=grid,
            in_specs=in_specs,
            out_specs=out_specs,
            scratch_shapes=[pltpu.VMEM((tile_m, hidden), jnp.float32)],
        ),
        compiler_params=pltpu.CompilerParams(
            dimension_semantics=("parallel",),
            vmem_limit_bytes=vmem_limit,
        ),
        cost_estimate=cost,
    )(alpha_arr, x_in, w1c, b1r, w2c, b2r, gamma, beta)

    return out2d[:m].reshape(*lead, hidden)


def _reference_ffn(x, w1, b1, w2, b2, alpha, gamma, beta, eps=1e-5):
    h = x @ w1 + b1
    h = jnp.where(h >= 0.0, h, alpha * h)               # PReLU
    h = h @ w2 + b2
    y = x + h
    mean = y.mean(axis=-1, keepdims=True)
    var = ((y - mean) ** 2).mean(axis=-1, keepdims=True)
    y = (y - mean) * lax.rsqrt(var + eps)
    return y * gamma + beta


if __name__ == "__main__":
    # Small, lane-dense config: hidden_size=128, decoder_ffn_dim=256.
    hidden_size, decoder_ffn_dim = 128, 256

    key = jax.random.PRNGKey(0)
    key, w1k, b1k, w2k, b2k, gk, bk = jax.random.split(key, 7)

    bound1 = 1.0 / (hidden_size ** 0.5)                 # torch Linear default init
    w1 = jax.random.uniform(w1k, (hidden_size, decoder_ffn_dim), jnp.float32, -bound1, bound1)
    b1 = jax.random.uniform(b1k, (decoder_ffn_dim,), jnp.float32, -bound1, bound1)
    bound2 = 1.0 / (decoder_ffn_dim ** 0.5)
    w2 = jax.random.uniform(w2k, (decoder_ffn_dim, hidden_size), jnp.float32, -bound2, bound2)
    b2 = jax.random.uniform(b2k, (hidden_size,), jnp.float32, -bound2, bound2)
    prelu_alpha = jnp.float32(0.25)                     # nn.PReLU default slope
    ln_weight = 1.0 + 0.1 * jax.random.normal(gk, (hidden_size,), jnp.float32)
    ln_bias = 0.1 * jax.random.normal(bk, (hidden_size,), jnp.float32)

    # TODO(synk): dropout / activation_dropout are training-only; identity here.

    # Case 1: tiny M=14 -> single row tile (pad to 16), single FFN chunk.
    key, xk1 = jax.random.split(key)
    x_small = jax.random.normal(xk1, (2, 7, hidden_size), jnp.float32)
    out1 = jax.block_until_ready(
        dab_detr_decoder_ffn_pallas(x_small, w1, b1, w2, b2,
                                    prelu_alpha, ln_weight, ln_bias))
    ref1 = _reference_ffn(x_small, w1, b1, w2, b2, prelu_alpha, ln_weight, ln_bias)
    assert out1.shape == x_small.shape
    assert jnp.allclose(out1, ref1, atol=2e-2, rtol=2e-2), \
        float(jnp.max(jnp.abs(out1 - ref1)))

    # Case 2: M=150 -> 2 row tiles of 80 (dual-TC path on v7x) and 2 FFN
    # chunks (exercises the VMEM-scratch accumulator and row padding).
    key, xk2 = jax.random.split(key)
    x_med = jax.random.normal(xk2, (3, 50, hidden_size), jnp.float32)
    out2 = jax.block_until_ready(
        dab_detr_decoder_ffn_pallas(x_med, w1, b1, w2, b2,
                                    prelu_alpha, ln_weight, ln_bias,
                                    ffn_chunk=128))
    ref2 = _reference_ffn(x_med, w1, b1, w2, b2, prelu_alpha, ln_weight, ln_bias)
    assert out2.shape == x_med.shape
    assert jnp.allclose(out2, ref2, atol=2e-2, rtol=2e-2), \
        float(jnp.max(jnp.abs(out2 - ref2)))

    print("KERNEL_OK")
</pallas_src>

<mosaic_0001>
module attributes {stable_mosaic.version = 11 : i64} {
  func.func @_ffn_kernel(%arg0: i32, %arg1: memref<1xf32, #tpu.memory_space<smem>>, %arg2: memref<16x128xbf16, #tpu.memory_space<vmem>>, %arg3: memref<128x256xbf16, #tpu.memory_space<vmem>>, %arg4: memref<1x256xbf16, #tpu.memory_space<vmem>>, %arg5: memref<256x128xbf16, #tpu.memory_space<vmem>>, %arg6: memref<1x128xf32, #tpu.memory_space<vmem>>, %arg7: memref<1x128xf32, #tpu.memory_space<vmem>>, %arg8: memref<1x128xf32, #tpu.memory_space<vmem>>, %arg9: memref<16x128xf32, #tpu.memory_space<vmem>>, %arg10: memref<16x128xf32, #tpu.memory_space<vmem>>) attributes {dimension_semantics = [#tpu.dimension_semantics<parallel>], iteration_bounds = array<i64: 1>, scalar_prefetch = 0 : i64, scratch_operands = 1 : i64, tpu.core_type = #tpu.core_type<tc>, window_params = [{transform_indices = @transform_0, window_bounds = array<i64: 1>}, {transform_indices = @transform_1, window_bounds = array<i64: 16, 128>}, {pipeline_mode = #tpu.pipeline_mode<synchronous>, transform_indices = @transform_2, window_bounds = array<i64: 128, 256>}, {pipeline_mode = #tpu.pipeline_mode<synchronous>, transform_indices = @transform_3, window_bounds = array<i64: 1, 256>}, {pipeline_mode = #tpu.pipeline_mode<synchronous>, transform_indices = @transform_4, window_bounds = array<i64: 256, 128>}, {pipeline_mode = #tpu.pipeline_mode<synchronous>, transform_indices = @transform_5, window_bounds = array<i64: 1, 128>}, {pipeline_mode = #tpu.pipeline_mode<synchronous>, transform_indices = @transform_6, window_bounds = array<i64: 1, 128>}, {pipeline_mode = #tpu.pipeline_mode<synchronous>, transform_indices = @transform_7, window_bounds = array<i64: 1, 128>}, {transform_indices = @transform_8, window_bounds = array<i64: 16, 128>}]} {
    %c0 = arith.constant 0 : index
    %0 = memref.load %arg1[%c0] : memref<1xf32, #tpu.memory_space<smem>>
    %1 = arith.truncf %0 : f32 to bf16
    %c0_0 = arith.constant 0 : index
    %c0_1 = arith.constant 0 : index
    %2 = vector.load %arg2[%c0_0, %c0_1] : memref<16x128xbf16, #tpu.memory_space<vmem>>, vector<16x128xbf16>
    %c0_2 = arith.constant 0 : index
    %c0_3 = arith.constant 0 : index
    %3 = vector.load %arg3[%c0_2, %c0_3] : memref<128x256xbf16, #tpu.memory_space<vmem>>, vector<128x256xbf16>
    %cst = arith.constant dense<0.000000e+00> : vector<16x256xf32>
    %4 = tpu.matmul %2, %3, %cst {dimension_numbers = #tpu.dot_dimension_numbers<[1], [0], [0], [1], [0, 0, 1, 1], [], []>} : vector<16x128xbf16>, vector<128x256xbf16>, vector<16x256xf32> -> vector<16x256xf32>
    %5 = arith.truncf %4 : vector<16x256xf32> to vector<16x256xbf16>
    %c0_4 = arith.constant 0 : index
    %c0_5 = arith.constant 0 : index
    %6 = vector.load %arg4[%c0_4, %c0_5] : memref<1x256xbf16, #tpu.memory_space<vmem>>, vector<1x256xbf16>
    %7 = vector.broadcast %6 : vector<1x256xbf16> to vector<16x256xbf16>
    %8 = arith.addf %5, %7 : vector<16x256xbf16>
    %cst_6 = arith.constant 0.000000e+00 : bf16
    %9 = vector.broadcast %cst_6 : bf16 to vector<16x256xbf16>
    %10 = arith.cmpf oge, %8, %9 : vector<16x256xbf16>
    %11 = vector.broadcast %1 : bf16 to vector<16x256xbf16>
    %12 = arith.mulf %11, %8 : vector<16x256xbf16>
    %13 = arith.select %10, %8, %12 : vector<16x256xi1>, vector<16x256xbf16>
    %c0_7 = arith.constant 0 : index
    %c0_8 = arith.constant 0 : index
    %14 = vector.load %arg5[%c0_7, %c0_8] : memref<256x128xbf16, #tpu.memory_space<vmem>>, vector<256x128xbf16>
    %cst_9 = arith.constant dense<0.000000e+00> : vector<16x128xf32>
    %15 = tpu.matmul %13, %14, %cst_9 {dimension_numbers = #tpu.dot_dimension_numbers<[1], [0], [0], [1], [0, 0, 1, 1], [], []>} : vector<16x256xbf16>, vector<256x128xbf16>, vector<16x128xf32> -> vector<16x128xf32>
    %c0_10 = arith.constant 0 : index
    %c0_11 = arith.constant 0 : index
    %16 = vector.load %arg10[%c0_10, %c0_11] : memref<16x128xf32, #tpu.memory_space<vmem>>, vector<16x128xf32>
    tpu.vector_store %arg10[%c0_10, %c0_11], %15 {strides = array<i32>} : memref<16x128xf32, #tpu.memory_space<vmem>>, vector<16x128xf32>,
    %c0_12 = arith.constant 0 : index
    %c0_13 = arith.constant 0 : index
    %17 = vector.load %arg10[%c0_12, %c0_13] : memref<16x128xf32, #tpu.memory_space<vmem>>, vector<16x128xf32>
    %c0_14 = arith.constant 0 : index
    %c0_15 = arith.constant 0 : index
    %18 = vector.load %arg6[%c0_14, %c0_15] : memref<1x128xf32, #tpu.memory_space<vmem>>, vector<1x128xf32>
    %19 = vector.broadcast %18 : vector<1x128xf32> to vector<16x128xf32>
    %20 = arith.addf %17, %19 : vector<16x128xf32>
    %c0_16 = arith.constant 0 : index
    %c0_17 = arith.constant 0 : index
    %21 = vector.load %arg2[%c0_16, %c0_17] : memref<16x128xbf16, #tpu.memory_space<vmem>>, vector<16x128xbf16>
    %22 = arith.extf %21 : vector<16x128xbf16> to vector<16x128xf32>
    %23 = arith.addf %20, %22 : vector<16x128xf32>
    %cst_18 = arith.constant dense<0.000000e+00> : vector<16xf32>
    %24 = vector.multi_reduction <add>, %23, %cst_18 [1] : vector<16x128xf32> to vector<16xf32>
    %25 = vector.shape_cast %24 : vector<16xf32> to vector<16x1xf32>
    %cst_19 = arith.constant 1.280000e+02 : f32
    %26 = vector.broadcast %cst_19 : f32 to vector<16x1xf32>
    %27 = arith.divf %25, %26 : vector<16x1xf32>
    %28 = vector.broadcast %27 : vector<16x1xf32> to vector<16x128xf32>
    %29 = arith.subf %23, %28 : vector<16x128xf32>
    %30 = arith.mulf %29, %29 : vector<16x128xf32>
    %cst_20 = arith.constant dense<0.000000e+00> : vector<16xf32>
    %31 = vector.multi_reduction <add>, %30, %cst_20 [1] : vector<16x128xf32> to vector<16xf32>
    %32 = vector.shape_cast %31 : vector<16xf32> to vector<16x1xf32>
    %cst_21 = arith.constant 1.280000e+02 : f32
    %33 = vector.broadcast %cst_21 : f32 to vector<16x1xf32>
    %34 = arith.divf %32, %33 : vector<16x1xf32>
    %cst_22 = arith.constant 9.99999974E-6 : f32
    %35 = vector.broadcast %cst_22 : f32 to vector<16x1xf32>
    %36 = arith.addf %34, %35 : vector<16x1xf32>
    %37 = math.rsqrt %36 : vector<16x1xf32>
    %38 = vector.broadcast %37 : vector<16x1xf32> to vector<16x128xf32>
    %39 = arith.mulf %29, %38 : vector<16x128xf32>
    %c0_23 = arith.constant 0 : index
    %c0_24 = arith.constant 0 : index
    %40 = vector.load %arg7[%c0_23, %c0_24] : memref<1x128xf32, #tpu.memory_space<vmem>>, vector<1x128xf32>
    %41 = vector.broadcast %40 : vector<1x128xf32> to vector<16x128xf32>
    %42 = arith.mulf %39, %41 : vector<16x128xf32>
    %c0_25 = arith.constant 0 : index
    %c0_26 = arith.constant 0 : index
    %43 = vector.load %arg8[%c0_25, %c0_26] : memref<1x128xf32, #tpu.memory_space<vmem>>, vector<1x128xf32>
    %44 = vector.broadcast %43 : vector<1x128xf32> to vector<16x128xf32>
    %45 = arith.addf %42, %44 : vector<16x128xf32>
    %c0_27 = arith.constant 0 : index
    %c0_28 = arith.constant 0 : index
    %46 = vector.load %arg9[%c0_27, %c0_28] : memref<16x128xf32, #tpu.memory_space<vmem>>, vector<16x128xf32>
    tpu.vector_store %arg9[%c0_27, %c0_28], %45 {strides = array<i32>} : memref<16x128xf32, #tpu.memory_space<vmem>>, vector<16x128xf32>,
    return
  }
  func.func @transform_0(%arg0: i32) -> i32 {
    %c0_i32 = arith.constant 0 : i32
    %c0_i32_0 = arith.constant 0 : i32
    return %c0_i32 : i32
  }
  func.func @transform_1(%arg0: i32) -> (i32, i32) {
    %c0_i32 = arith.constant 0 : i32
    %c0_i32_0 = arith.constant 0 : i32
    return %arg0, %c0_i32 : i32, i32
  }
  func.func @transform_2(%arg0: i32) -> (i32, i32) {
    %c0_i32 = arith.constant 0 : i32
    %c0_i32_0 = arith.constant 0 : i32
    %c0_i32_1 = arith.constant 0 : i32
    return %c0_i32, %c0_i32_0 : i32, i32
  }
  func.func @transform_3(%arg0: i32) -> (i32, i32) {
    %c0_i32 = arith.constant 0 : i32
    %c0_i32_0 = arith.constant 0 : i32
    %c0_i32_1 = arith.constant 0 : i32
    return %c0_i32, %c0_i32_0 : i32, i32
  }
  func.func @transform_4(%arg0: i32) -> (i32, i32) {
    %c0_i32 = arith.constant 0 : i32
    %c0_i32_0 = arith.constant 0 : i32
    %c0_i32_1 = arith.constant 0 : i32
    return %c0_i32, %c0_i32_0 : i32, i32
  }
  func.func @transform_5(%arg0: i32) -> (i32, i32) {
    %c0_i32 = arith.constant 0 : i32
    %c0_i32_0 = arith.constant 0 : i32
    %c0_i32_1 = arith.constant 0 : i32
    return %c0_i32, %c0_i32_0 : i32, i32
  }
  func.func @transform_6(%arg0: i32) -> (i32, i32) {
    %c0_i32 = arith.constant 0 : i32
    %c0_i32_0 = arith.constant 0 : i32
    %c0_i32_1 = arith.constant 0 : i32
    return %c0_i32, %c0_i32_0 : i32, i32
  }
  func.func @transform_7(%arg0: i32) -> (i32, i32) {
    %c0_i32 = arith.constant 0 : i32
    %c0_i32_0 = arith.constant 0 : i32
    %c0_i32_1 = arith.constant 0 : i32
    return %c0_i32, %c0_i32_0 : i32, i32
  }
  func.func @transform_8(%arg0: i32) -> (i32, i32) {
    %c0_i32 = arith.constant 0 : i32
    %c0_i32_0 = arith.constant 0 : i32
    return %arg0, %c0_i32 : i32, i32
  }
}

</mosaic_0001>

<llo_original>
// kernel: tpu_custom_call.1
$region0: #{tpu_custom_call.1}
  #allocation0 [shape = 'u32[]', space=smem, size = 0x4, offset = 0x4, fixed_abs, tag = 'smem constant byte address 0x4 - core index']
  #allocation1 [shape = 'u32[144,128]{1,0:T(1,128)}', space=vmem, size = 0x12000, scoped, tag = 'internal scratch']
  #allocation2 [shape = 'f32[16,128]{1,0:T(8,128)}', space=vmem, size = 0x2000, scoped, tag = 'scratch operand']
  #allocation3 [shape = 'f32[1]{0:T(128)S(6)}', space=smem, size = 0x200, scoped, tag = 'scoped memory for tpu_custom_call.1']
  %s0 = inlined_call_operand.<no memory space> [shape: f32[1], index: 0, kind: input, shape index: {}]
  %s1 = inlined_call_operand.hbm [shape: bf16[16,128], index: 1, kind: input, shape index: {}]
  %s2 = inlined_call_operand.hbm [shape: bf16[128,256], index: 2, kind: input, shape index: {}]
  %s3 = inlined_call_operand.vmem [shape: bf16[1,256], index: 3, kind: input, shape index: {}]
  %s4 = inlined_call_operand.hbm [shape: bf16[256,128], index: 4, kind: input, shape index: {}]
  %s5 = inlined_call_operand.vmem [shape: f32[1,128], index: 5, kind: input, shape index: {}]
  %s6 = inlined_call_operand.vmem [shape: f32[1,128], index: 6, kind: input, shape index: {}]
  %s7 = inlined_call_operand.vmem [shape: f32[1,128], index: 7, kind: input, shape index: {}]
  %s8 = inlined_call_operand.hbm [shape: f32[16,128], index: 8, kind: output, shape index: {}]
  %s9 = sld [smem:[#allocation0]]
  $region54: #{tpu_custom_call.1} parent=0
    _
  %s11 = ssub.s32 1, %s9
  %s12 = scalar_select 0, %s11, %s9
  %13 = sst [smem:[#allocation3]] %s0
  $region1: #{tpu_custom_call.1} parent=0
    #allocation4 [shape = 'u8[4096]{0}', space=vmem, size = 0x1000, scoped, tag = 'input window, operand 1, single buffered']
    #allocation5 [shape = 's32[1]{0}', space=sflag, size = 0x4, scoped, tag = 'scoped memory for tpu_custom_call.1']
    #allocation6 [shape = 's32[1]{0}', space=sflag, size = 0x4, scoped, tag = 'scoped memory for tpu_custom_call.1']
    #allocation7 [shape = 'u8[65536]{0}', space=vmem, size = 0x10000, scoped, tag = 'input window, operand 2, single buffered']
    #allocation8 [shape = 's32[1]{0}', space=sflag, size = 0x4, scoped, tag = 'scoped memory for tpu_custom_call.1']
    #allocation9 [shape = 'u8[65536]{0}', space=vmem, size = 0x10000, scoped, tag = 'input window, operand 4, single buffered']
    #allocation10 [shape = 'u8[8192]{0}', space=vmem, size = 0x2000, scoped, tag = 'output window, operand 0, single buffered']
    %14 = vsyncpa [#allocation5], 0
    %15 = vsyncpa [#allocation8], 0
    %16 = vsyncpa [#allocation6], 0
    // Predicated region
    $region2: #{tpu_custom_call.1} parent=1 // pred_check
      _
    $region3: #{tpu_custom_call.1} parent=1 // pred_check_branch
      %18 = sbr.rel (0) target = $region5
    $region4: #{tpu_custom_call.1} parent=1 // pred_region
      _
    $region5: #{tpu_custom_call.1} parent=1 // pred_fallthru
      _
    // Predicated region
    $region6: #{tpu_custom_call.1} parent=1 // pred_check
      _
    $region7: #{tpu_custom_call.1} parent=1 // pred_check_branch
      %20 = sbr.rel (0) target = $region9
    $region8: #{tpu_custom_call.1} parent=1 // pred_region
      %s22 = ssub.s32 128, 128
      %23 = vsyncadd [#allocation5], %s22
      %s24 = sshll.u32 [#allocation4], 4
      %s25 = int_to_ptr.vmem [resolvable:$true] %s24
      %30 = dma.hbm_to_vmem [thread:$0]  %s1, 128, %s25, [#allocation5], 64, 64, 4
    $region9: #{tpu_custom_call.1} parent=1 // pred_fallthru
      _
    // Predicated region
    $region10: #{tpu_custom_call.1} parent=1 // pred_check
      _
    $region11: #{tpu_custom_call.1} parent=1 // pred_check_branch
      %32 = sbr.rel (0) target = $region13
    $region12: #{tpu_custom_call.1} parent=1 // pred_region
      %s34 = ssub.s32 2048, 2048
      %35 = vsyncadd [#allocation8], %s34
      %s36 = sshll.u32 [#allocation7], 4
      %s37 = int_to_ptr.vmem [resolvable:$true] %s36
      %42 = dma.hbm_to_vmem [thread:$0]  %s2, 2048, %s37, [#allocation8], 128, 128, 8
    $region13: #{tpu_custom_call.1} parent=1 // pred_fallthru
      _
    // Predicated region
    $region14: #{tpu_custom_call.1} parent=1 // pred_check
      _
    $region15: #{tpu_custom_call.1} parent=1 // pred_check_branch
      %44 = sbr.rel (0) target = $region17
    $region16: #{tpu_custom_call.1} parent=1 // pred_region
      _
    $region17: #{tpu_custom_call.1} parent=1 // pred_fallthru
      _
    // Predicated region
    $region18: #{tpu_custom_call.1} parent=1 // pred_check
      _
    $region19: #{tpu_custom_call.1} parent=1 // pred_check_branch
      %46 = sbr.rel (0) target = $region21
    $region20: #{tpu_custom_call.1} parent=1 // pred_region
      %s48 = ssub.s32 2048, 2048
      %49 = vsyncadd [#allocation8], %s48
      %s50 = sshll.u32 [#allocation9], 4
      %s51 = int_to_ptr.vmem [resolvable:$true] %s50
      %56 = dma.hbm_to_vmem [thread:$0]  %s4, 2048, %s51, [#allocation8], 64, 64, 4
    $region21: #{tpu_custom_call.1} parent=1 // pred_fallthru
      _
    // Predicated region
    $region22: #{tpu_custom_call.1} parent=1 // pred_check
      _
    $region23: #{tpu_custom_call.1} parent=1 // pred_check_branch
      %58 = sbr.rel (0) target = $region25
    $region24: #{tpu_custom_call.1} parent=1 // pred_region
      _
    $region25: #{tpu_custom_call.1} parent=1 // pred_fallthru
      _
    // Predicated region
    $region26: #{tpu_custom_call.1} parent=1 // pred_check
      _
    $region27: #{tpu_custom_call.1} parent=1 // pred_check_branch
      %60 = sbr.rel (0) target = $region29
    $region28: #{tpu_custom_call.1} parent=1 // pred_region
      _
    $region29: #{tpu_custom_call.1} parent=1 // pred_fallthru
      _
    // Predicated region
    $region30: #{tpu_custom_call.1} parent=1 // pred_check
      _
    $region31: #{tpu_custom_call.1} parent=1 // pred_check_branch
      %62 = sbr.rel (0) target = $region33
    $region32: #{tpu_custom_call.1} parent=1 // pred_region
      _
    $region33: #{tpu_custom_call.1} parent=1 // pred_fallthru
      _
    // Predicated region
    $region34: #{tpu_custom_call.1} parent=1 // pred_check
      _
    $region35: #{tpu_custom_call.1} parent=1 // pred_check_branch
      %64 = sbr.rel (0) target = $region37
    $region36: #{tpu_custom_call.1} parent=1 // pred_region
      %65 = dma.done [#allocation5], 128
    $region37: #{tpu_custom_call.1} parent=1 // pred_fallthru
      _
    // Predicated region
    $region38: #{tpu_custom_call.1} parent=1 // pred_check
      _
    $region39: #{tpu_custom_call.1} parent=1 // pred_check_branch
      %67 = sbr.rel (0) target = $region41
    $region40: #{tpu_custom_call.1} parent=1 // pred_region
      %68 = dma.done [#allocation8], 2048
    $region41: #{tpu_custom_call.1} parent=1 // pred_fallthru
      _
    // Predicated region
    $region42: #{tpu_custom_call.1} parent=1 // pred_check
      _
    $region43: #{tpu_custom_call.1} parent=1 // pred_check_branch
      %70 = sbr.rel (0) target = $region45
    $region44: #{tpu_custom_call.1} parent=1 // pred_region
      %71 = dma.done [#allocation8], 2048
    $region45: #{tpu_custom_call.1} parent=1 // pred_fallthru
      _
    %s73 = sld [smem:[#allocation3]]
    %p75 = scmp.ne.f32.partialorder %s73, %s73
    %s76 = sshrl.u32 %s73, 16
    %s77 = sand.u32 %s76, 1
    %s78 = sadd.s32 32767, %s77
    %s79 = sadd.s32 %s73, %s78
    %s80 = sand.u32 %s79, 4294901760
    %s81 = scalar_select %p75, 2143289344, %s80
    %s83 = sshrl.u32 %s81, 16
    %v84 = vld [vmem:[#allocation4] sm:$0xf]
    %v85 = vld [vmem:[#allocation4 + $0x4] sm:$0xf]
    %v86 = vld [vmem:[#allocation7] sm:$0xff]
    %v87 = vld [vmem:[#allocation7 + $0x8] sm:$0xff]
    %v88 = vld [vmem:[#allocation7 + $0x10] sm:$0xff]
    %v89 = vld [vmem:[#allocation7 + $0x18] sm:$0xff]
    %v90 = vld [vmem:[#allocation7 + $0x20] sm:$0xff]
    %v91 = vld [vmem:[#allocation7 + $0x28] sm:$0xff]
    %v92 = vld [vmem:[#allocation7 + $0x30] sm:$0xff]
    %v93 = vld [vmem:[#allocation7 + $0x38] sm:$0xff]
    %v94 = vld [vmem:[#allocation7 + $0x40] sm:$0xff]
    %v95 = vld [vmem:[#allocation7 + $0x48] sm:$0xff]
    %v96 = vld [vmem:[#allocation7 + $0x50] sm:$0xff]
    %v97 = vld [vmem:[#allocation7 + $0x58] sm:$0xff]
    %v98 = vld [vmem:[#allocation7 + $0x60] sm:$0xff]
    %v99 = vld [vmem:[#allocation7 + $0x68] sm:$0xff]
    %v100 = vld [vmem:[#allocation7 + $0x70] sm:$0xff]
    %v101 = vld [vmem:[#allocation7 + $0x78] sm:$0xff]
    %v104 = vunpack.c.l.b16 %v84
    %v105 = vunpack.c.l.b16 %v85
    %v106 = vpack.c.b16 %v105, %v104
    %v124 = vunpack.c.l.b16 %v86
    %v125 = vunpack.c.h.b16 %v86
    %v126 = vunpack.c.l.b16 %v87
    %v127 = vunpack.c.h.b16 %v87
    %v128 = vunpack.c.l.b16 %v88
    %v129 = vunpack.c.h.b16 %v88
    %v130 = vunpack.c.l.b16 %v89
    %v131 = vunpack.c.h.b16 %v89
    %v132 = vunpack.c.l.b16 %v90
    %v133 = vunpack.c.h.b16 %v90
    %v134 = vunpack.c.l.b16 %v91
    %v135 = vunpack.c.h.b16 %v91
    %v136 = vunpack.c.l.b16 %v92
    %v137 = vunpack.c.h.b16 %v92
    %v138 = vunpack.c.l.b16 %v93
    %v139 = vunpack.c.h.b16 %v93
    %v140 = vunpack.c.l.b16 %v94
    %v141 = vunpack.c.h.b16 %v94
    %v142 = vunpack.c.l.b16 %v95
    %v143 = vunpack.c.h.b16 %v95
    %v144 = vunpack.c.l.b16 %v96
    %v145 = vunpack.c.h.b16 %v96
    %v146 = vunpack.c.l.b16 %v97
    %v147 = vunpack.c.h.b16 %v97
    %v148 = vunpack.c.l.b16 %v98
    %v149 = vunpack.c.h.b16 %v98
    %v150 = vunpack.c.l.b16 %v99
    %v151 = vunpack.c.h.b16 %v99
    %v152 = vunpack.c.l.b16 %v100
    %v153 = vunpack.c.h.b16 %v100
    %v154 = vunpack.c.l.b16 %v101
    %v155 = vunpack.c.h.b16 %v101
    %v156 = vpack.c.b16 %v126, %v124
    %v157 = vpack.c.b16 %v127, %v125
    %v158 = vpack.c.b16 %v130, %v128
    %v159 = vpack.c.b16 %v131, %v129
    %v160 = vpack.c.b16 %v134, %v132
    %v161 = vpack.c.b16 %v135, %v133
    %v162 = vpack.c.b16 %v138, %v136
    %v163 = vpack.c.b16 %v139, %v137
    %v164 = vpack.c.b16 %v142, %v140
    %v165 = vpack.c.b16 %v143, %v141
    %v166 = vpack.c.b16 %v146, %v144
    %v167 = vpack.c.b16 %v147, %v145
    %v168 = vpack.c.b16 %v150, %v148
    %v169 = vpack.c.b16 %v151, %v149
    %v170 = vpack.c.b16 %v154, %v152
    %v171 = vpack.c.b16 %v155, %v153
    %188 = vmatprep.subr.bf16.mxu0 %v157
    %189 = vmatpush1.bf16.msra.mxu0 %v156
    %190 = vmatprep.subr.bf16.mxu0 %v159
    %191 = vmatpush1.bf16.msra.mxu0 %v158
    %192 = vmatprep.subr.bf16.mxu0 %v161
    %193 = vmatpush1.bf16.msra.mxu0 %v160
    %194 = vmatprep.subr.bf16.mxu0 %v163
    %195 = vmatpush1.bf16.msra.mxu0 %v162
    %196 = vmatprep.subr.bf16.mxu0 %v165
    %197 = vmatpush1.bf16.msra.mxu0 %v164
    %198 = vmatprep.subr.bf16.mxu0 %v167
    %199 = vmatpush1.bf16.msra.mxu0 %v166
    %200 = vmatprep.subr.bf16.mxu0 %v169
    %201 = vmatpush1.bf16.msra.mxu0 %v168
    %202 = vmatprep.subr.bf16.mxu0 %v171
    %203 = vmatpush1.bf16.msra.mxu0 %v170
    %204 = vmatprep.subr.bf16.mxu0 0
    %205 = vmatpush1.bf16.msra.mxu0 0
    %206 = vmatprep.subr.bf16.mxu0 0
    %207 = vmatpush1.bf16.msra.mxu0 0
    %208 = vmatprep.subr.bf16.mxu0 0
    %209 = vmatpush1.bf16.msra.mxu0 0
    %210 = vmatprep.subr.bf16.mxu0 0
    %211 = vmatpush1.bf16.msra.mxu0 0
    %212 = vmatprep.subr.bf16.mxu0 0
    %213 = vmatpush1.bf16.msra.mxu0 0
    %214 = vmatprep.subr.bf16.mxu0 0
    %215 = vmatpush1.bf16.msra.mxu0 0
    %216 = vmatprep.subr.bf16.mxu0 0
    %217 = vmatpush1.bf16.msra.mxu0 0
    %218 = vmatprep.subr.bf16.mxu0 0
    %219 = vmatpush1.bf16.msra.mxu0 0
    %220 = vmatprep.mubr.bf16.mxu0 0
    %221 = vmatmul.mubr.bf16.gmra.mrb[0].mxu0 %v106
    %v222 = vpop.f32.mrb[0].mxu0
    %v223 = vadd.f32 0.0, %v222
    %v224 = vpop.f32.mrb[0].mxu0
    %v225 = vadd.f32 0.0, %v224
    %v226 = vpop.f32.mrb[0].mxu0
    %v227 = vadd.f32 0.0, %v226
    %v228 = vpop.f32.mrb[0].mxu0
    %v229 = vadd.f32 0.0, %v228
    %230 = vdwg.mxu0
    %v231 = vpack.c.bf16 %v227, %v223
    %v232 = vpack.c.bf16 %v229, %v225
    %v233 = vld [vmem:[%s3] sm:$0x3]
    %v236 = vunpack.c.l.s4 1966171168
    %v237 = vunpack.c.0.s8 %v236
    %v238 = vlaneseq
    %v239 = vshrl.u32 %v238, 7
    %v240 = vsub.s32 %v237, %v239
    %v241 = vrot.slane %v233, %v240
    %v242 = vcombine.high %v241, %v241
    %v244 = vunpack.c.l.s4 1966171168
    %v245 = vunpack.c.0.s8 %v244
    %v246 = vlaneseq
    %v247 = vshrl.u32 %v246, 7
    %v248 = vsub.s32 %v245, %v247
    %v249 = vrot.slane %v241, %v248
    %v251 = vunpack.c.l.s4 1966171168
    %v252 = vunpack.c.0.s8 %v251
    %v253 = vlaneseq
    %v254 = vshrl.u32 %v253, 7
    %v255 = vsub.s32 %v252, %v254
    %v256 = vrot.slane %v242, %v255
    %v258 = vpack.i.b16 %v249, %v249
    %v260 = vlaneseq
    %v261 = vshrl.u32 %v260, 7
    %v262 = vsub.s32 0, %v261
    %v263 = vrot.slane %v258, %v262
    %v265 = vpack.i.b16 %v256, %v256
    %v267 = vlaneseq
    %v268 = vshrl.u32 %v267, 7
    %v269 = vsub.s32 0, %v268
    %v270 = vrot.slane %v265, %v269
    %v271 = vadd.bf16 %v231, %v263
    %v272 = vadd.bf16 %v232, %v270
    %vm273 = vcmp.ge.bf16.partialorder %v271, 0
    %vm274 = vcmp.ge.bf16.partialorder %v272, 0
    %s275 = sshll.u32 %s83, 16
    %s276 = sor.u32 %s83, %s275
    %v277 = vstv %s276
    %v279 = vmul.bf16 %v277, %v271
    %v280 = vmul.bf16 %v277, %v272
    %v281 = vsel %vm273, %v271, %v279
    %v282 = vsel %vm274, %v272, %v280
    %v283 = vld [vmem:[#allocation9] sm:$0xf]
    %v284 = vld [vmem:[#allocation9 + $0x4] sm:$0xf]
    %v285 = vld [vmem:[#allocation9 + $0x8] sm:$0xf]
    %v286 = vld [vmem:[#allocation9 + $0xc] sm:$0xf]
    %v287 = vld [vmem:[#allocation9 + $0x10] sm:$0xf]
    %v288 = vld [vmem:[#allocation9 + $0x14] sm:$0xf]
    %v289 = vld [vmem:[#allocation9 + $0x18] sm:$0xf]
    %v290 = vld [vmem:[#allocation9 + $0x1c] sm:$0xf]
    %v291 = vld [vmem:[#allocation9 + $0x20] sm:$0xf]
    %v292 = vld [vmem:[#allocation9 + $0x24] sm:$0xf]
    %v293 = vld [vmem:[#allocation9 + $0x28] sm:$0xf]
    %v294 = vld [vmem:[#allocation9 + $0x2c] sm:$0xf]
    %v295 = vld [vmem:[#allocation9 + $0x30] sm:$0xf]
    %v296 = vld [vmem:[#allocation9 + $0x34] sm:$0xf]
    %v297 = vld [vmem:[#allocation9 + $0x38] sm:$0xf]
    %v298 = vld [vmem:[#allocation9 + $0x3c] sm:$0xf]
    %v299 = vld [vmem:[#allocation9 + $0x40] sm:$0xf]
    %v300 = vld [vmem:[#allocation9 + $0x44] sm:$0xf]
    %v301 = vld [vmem:[#allocation9 + $0x48] sm:$0xf]
    %v302 = vld [vmem:[#allocation9 + $0x4c] sm:$0xf]
    %v303 = vld [vmem:[#allocation9 + $0x50] sm:$0xf]
    %v304 = vld [vmem:[#allocation9 + $0x54] sm:$0xf]
    %v305 = vld [vmem:[#allocation9 + $0x58] sm:$0xf]
    %v306 = vld [vmem:[#allocation9 + $0x5c] sm:$0xf]
    %v307 = vld [vmem:[#allocation9 + $0x60] sm:$0xf]
    %v308 = vld [vmem:[#allocation9 + $0x64] sm:$0xf]
    %v309 = vld [vmem:[#allocation9 + $0x68] sm:$0xf]
    %v310 = vld [vmem:[#allocation9 + $0x6c] sm:$0xf]
    %v311 = vld [vmem:[#allocation9 + $0x70] sm:$0xf]
    %v312 = vld [vmem:[#allocation9 + $0x74] sm:$0xf]
    %v313 = vld [vmem:[#allocation9 + $0x78] sm:$0xf]
    %v314 = vld [vmem:[#allocation9 + $0x7c] sm:$0xf]
    %v347 = vunpack.c.l.b16 %v283
    %v348 = vunpack.c.l.b16 %v284
    %v349 = vunpack.c.l.b16 %v285
    %v350 = vunpack.c.l.b16 %v286
    %v351 = vunpack.c.l.b16 %v287
    %v352 = vunpack.c.l.b16 %v288
    %v353 = vunpack.c.l.b16 %v289
    %v354 = vunpack.c.l.b16 %v290
    %v355 = vunpack.c.l.b16 %v291
    %v356 = vunpack.c.l.b16 %v292
    %v357 = vunpack.c.l.b16 %v293
    %v358 = vunpack.c.l.b16 %v294
    %v359 = vunpack.c.l.b16 %v295
    %v360 = vunpack.c.l.b16 %v296
    %v361 = vunpack.c.l.b16 %v297
    %v362 = vunpack.c.l.b16 %v298
    %v363 = vunpack.c.l.b16 %v299
    %v364 = vunpack.c.l.b16 %v300
    %v365 = vunpack.c.l.b16 %v301
    %v366 = vunpack.c.l.b16 %v302
    %v367 = vunpack.c.l.b16 %v303
    %v368 = vunpack.c.l.b16 %v304
    %v369 = vunpack.c.l.b16 %v305
    %v370 = vunpack.c.l.b16 %v306
    %v371 = vunpack.c.l.b16 %v307
    %v372 = vunpack.c.l.b16 %v308
    %v373 = vunpack.c.l.b16 %v309
    %v374 = vunpack.c.l.b16 %v310
    %v375 = vunpack.c.l.b16 %v311
    %v376 = vunpack.c.l.b16 %v312
    %v377 = vunpack.c.l.b16 %v313
    %v378 = vunpack.c.l.b16 %v314
    %v379 = vpack.c.b16 %v348, %v347
    %v380 = vpack.c.b16 %v350, %v349
    %v381 = vpack.c.b16 %v352, %v351
    %v382 = vpack.c.b16 %v354, %v353
    %v383 = vpack.c.b16 %v356, %v355
    %v384 = vpack.c.b16 %v358, %v357
    %v385 = vpack.c.b16 %v360, %v359
    %v386 = vpack.c.b16 %v362, %v361
    %v387 = vpack.c.b16 %v364, %v363
    %v388 = vpack.c.b16 %v366, %v365
    %v389 = vpack.c.b16 %v368, %v367
    %v390 = vpack.c.b16 %v370, %v369
    %v391 = vpack.c.b16 %v372, %v371
    %v392 = vpack.c.b16 %v374, %v373
    %v393 = vpack.c.b16 %v376, %v375
    %v394 = vpack.c.b16 %v378, %v377
    %411 = vmatprep.subr.bf16.mxu0 0
    %412 = vmatpush1.bf16.msra.mxu0 %v379
    %413 = vmatprep.subr.bf16.mxu0 0
    %414 = vmatpush1.bf16.msra.mxu0 %v380
    %415 = vmatprep.subr.bf16.mxu0 0
    %416 = vmatpush1.bf16.msra.mxu0 %v381
    %417 = vmatprep.subr.bf16.mxu0 0
    %418 = vmatpush1.bf16.msra.mxu0 %v382
    %419 = vmatprep.subr.bf16.mxu0 0
    %420 = vmatpush1.bf16.msra.mxu0 %v383
    %421 = vmatprep.subr.bf16.mxu0 0
    %422 = vmatpush1.bf16.msra.mxu0 %v384
    %423 = vmatprep.subr.bf16.mxu0 0
    %424 = vmatpush1.bf16.msra.mxu0 %v385
    %425 = vmatprep.subr.bf16.mxu0 0
    %426 = vmatpush1.bf16.msra.mxu0 %v386
    %427 = vmatprep.subr.bf16.mxu0 0
    %428 = vmatpush1.bf16.msra.mxu0 %v387
    %429 = vmatprep.subr.bf16.mxu0 0
    %430 = vmatpush1.bf16.msra.mxu0 %v388
    %431 = vmatprep.subr.bf16.mxu0 0
    %432 = vmatpush1.bf16.msra.mxu0 %v389
    %433 = vmatprep.subr.bf16.mxu0 0
    %434 = vmatpush1.bf16.msra.mxu0 %v390
    %435 = vmatprep.subr.bf16.mxu0 0
    %436 = vmatpush1.bf16.msra.mxu0 %v391
    %437 = vmatprep.subr.bf16.mxu0 0
    %438 = vmatpush1.bf16.msra.mxu0 %v392
    %439 = vmatprep.subr.bf16.mxu0 0
    %440 = vmatpush1.bf16.msra.mxu0 %v393
    %441 = vmatprep.subr.bf16.mxu0 0
    %442 = vmatpush1.bf16.msra.mxu0 %v394
    %443 = vmatprep.mubr.bf16.mxu0 %v282
    %444 = vmatmul.mubr.bf16.gmra.mrb[0].mxu0 %v281
    %v445 = vpop.f32.mrb[0].mxu0
    %v446 = vadd.f32 0.0, %v445
    %v447 = vpop.f32.mrb[0].mxu0
    %v448 = vpop.f32.mrb[0].mxu0
    %v449 = vadd.f32 0.0, %v448
    %v450 = vpop.f32.mrb[0].mxu0
    %451 = vdwg.mxu0
    %452 = vst [vmem:[#allocation2] sm:$0xff] %v446
    %453 = vst [vmem:[#allocation2 + $0x8] sm:$0xff] %v449
    %v454 = vld [vmem:[#allocation2] sm:$0xff]
    %v455 = vld [vmem:[#allocation2 + $0x8] sm:$0xff]
    %v456 = vld [vmem:[%s5] sm:$0x1]
    %v458 = vlaneseq
    %v459 = vshrl.u32 %v458, 7
    %v460 = vsub.s32 0, %v459
    %v461 = vrot.slane %v456, %v460
    %v463 = vadd.f32 %v454, %v461
    %v464 = vadd.f32 %v455, %v461
    %v465 = vld [vmem:[#allocation4] sm:$0xf]
    %v466 = vld [vmem:[#allocation4 + $0x4] sm:$0xf]
    %v467 = vunpack.c.l.bf16 %v465
    %v468 = vunpack.c.l.bf16 %v466
    %v469 = vadd.f32 %v463, %v467
    %v470 = vadd.f32 %v464, %v468
    %471 = vadd.xlane.f32.xlu0 %v469
    %v472 = vpop.xlane.xlu0 %471
    %473 = vadd.xlane.f32.xlu0 %v470
    %v474 = vpop.xlane.xlu0 %473
    %v475 = vrcp.pop 128.0
    %v476 = vmul.f32 %v472, %v475
    %v477 = vmul.f32 %v474, %v475
    %v478 = vsub.f32 %v469, %v476
    %v479 = vsub.f32 %v470, %v477
    %v480 = vmul.f32 %v478, %v478
    %v481 = vmul.f32 %v479, %v479
    %482 = vadd.xlane.f32.xlu0 %v480
    %v483 = vpop.xlane.xlu0 %482
    %484 = vadd.xlane.f32.xlu0 %v481
    %v485 = vpop.xlane.xlu0 %484
    %v486 = vmul.f32 %v483, %v475
    %v487 = vmul.f32 %v485, %v475
    %v488 = vadd.f32 %v486, 1e-05
    %v489 = vadd.f32 %v487, 1e-05
    %v490 = vrsqrt.pop %v488
    %v491 = vrsqrt.pop %v489
    %v492 = vmul.f32 %v478, %v490
    %v493 = vmul.f32 %v479, %v491
    %v494 = vld [vmem:[%s6] sm:$0x1]
    %v496 = vlaneseq
    %v497 = vshrl.u32 %v496, 7
    %v498 = vsub.s32 0, %v497
    %v499 = vrot.slane %v494, %v498
    %v501 = vmul.f32 %v492, %v499
    %v502 = vmul.f32 %v493, %v499
    %v503 = vld [vmem:[%s7] sm:$0x1]
    %v505 = vlaneseq
    %v506 = vshrl.u32 %v505, 7
    %v507 = vsub.s32 0, %v506
    %v508 = vrot.slane %v503, %v507
    %v510 = vadd.f32 %v501, %v508
    %v511 = vadd.f32 %v502, %v508
    %512 = vst [vmem:[#allocation10] sm:$0xff] %v510
    %513 = vst [vmem:[#allocation10 + $0x8] sm:$0xff] %v511
    // Predicated region
    $region46: #{tpu_custom_call.1} parent=1 // pred_check
      _
    $region47: #{tpu_custom_call.1} parent=1 // pred_check_branch
      %515 = sbr.rel (0) target = $region49
    $region48: #{tpu_custom_call.1} parent=1 // pred_region
      %s517 = ssub.s32 256, 256
      %518 = vsyncadd [#allocation6], %s517
      %s519 = sshll.u32 [#allocation10], 4
      %s520 = int_to_ptr.vmem [resolvable:$true] %s519
      %525 = dma.vmem_to_hbm [thread:$0]  %s520, 256, %s8, [#allocation6], 128, 128, 8
    $region49: #{tpu_custom_call.1} parent=1 // pred_fallthru
      _
    // Predicated region
    $region50: #{tpu_custom_call.1} parent=1 // pred_check
      _
    $region51: #{tpu_custom_call.1} parent=1 // pred_check_branch
      %527 = sbr.rel (0) target = $region53
    $region52: #{tpu_custom_call.1} parent=1 // pred_region
      %528 = dma.done [#allocation6], 256
    $region53: #{tpu_custom_call.1} parent=1 // pred_fallthru
      _
    %529 = vsyncpa [#allocation5], 1
    %530 = vsyncpa [#allocation8], 1
    %531 = vsyncpa [#allocation6], 1

</llo_original>
